<compile_context>
chip_gen: v7x
topology: tpu7x:2x2x1
jax: 0.10.0
libtpu: 0.0.40
codegen_flags: <defaults>
</compile_context>

<pallas_src>
import functools

import jax
import jax.numpy as jnp
from jax.experimental import pallas as pl
from jax.experimental.pallas import tpu as pltpu


# ---------------------------------------------------------------------------
# Kernel
# ---------------------------------------------------------------------------
def _qnet_kernel(x_ref,
                 w1_ref, b1_ref,
                 w2_ref, b2_ref,
                 w3_ref, b3_ref,
                 w4_ref, b4_ref,
                 w5_ref, b5_ref,
                 out_ref):
    """Fused forward pass: 4x (Linear + ReLU) followed by a final Linear.

    bf16 operands feed the MXU, every dot accumulates in fp32
    (preferred_element_type), biases are added in fp32, hidden activations are
    cast back to bf16 between layers.
    """
    h = x_ref[...].astype(jnp.bfloat16)

    h = jnp.dot(h, w1_ref[...], preferred_element_type=jnp.float32) + b1_ref[...]
    h = jnp.maximum(h, 0.0).astype(jnp.bfloat16)

    h = jnp.dot(h, w2_ref[...], preferred_element_type=jnp.float32) + b2_ref[...]
    h = jnp.maximum(h, 0.0).astype(jnp.bfloat16)

    h = jnp.dot(h, w3_ref[...], preferred_element_type=jnp.float32) + b3_ref[...]
    h = jnp.maximum(h, 0.0).astype(jnp.bfloat16)

    h = jnp.dot(h, w4_ref[...], preferred_element_type=jnp.float32) + b4_ref[...]
    h = jnp.maximum(h, 0.0).astype(jnp.bfloat16)

    out = jnp.dot(h, w5_ref[...], preferred_element_type=jnp.float32) + b5_ref[...]
    out_ref[...] = out.astype(out_ref.dtype)


# ---------------------------------------------------------------------------
# Helpers
# ---------------------------------------------------------------------------
def _round_up(x, m):
    return (x + m - 1) // m * m


_MAX_TB = 2048  # activation tiles at 2048 rows are only a few MiB of VMEM


def _choose_tiling(batch):
    """Pick (batch_tile, padded_batch).

    * tile is a multiple of 8 sublanes and at most _MAX_TB rows,
    * for batch >= 16 the grid gets an even number of >= 2 steps so that
      v7x's two TensorCores both receive work (harmless on v5e/v6e).
    """
    b8 = _round_up(max(batch, 1), 8)
    n_steps = pl.cdiv(b8, _MAX_TB)
    if batch >= 16:
        n_steps = max(n_steps, 2)
        if n_steps % 2:
            n_steps += 1
    tb = _round_up(pl.cdiv(b8, n_steps), 8)
    return tb, tb * n_steps


# ---------------------------------------------------------------------------
# Parameter prep (done once, outside the per-step jit)
# ---------------------------------------------------------------------------
def prepare_params(params):
    """Cast weights to bf16 and pad the final layer to a lane-dense 128 width."""
    action_size = params["w5"].shape[1]
    out_pad = _round_up(action_size, 128)   # keep at 128; do NOT round to 256
    prepped = {}
    for i in range(1, 6):
        w = params[f"w{i}"].astype(jnp.float32)
        b = params[f"b{i}"].astype(jnp.float32)
        if i == 5:
            pad = out_pad - action_size
            w = jnp.pad(w, ((0, 0), (0, pad)))
            b = jnp.pad(b, ((0, 0), (0, pad)))
        prepped[f"w{i}"] = w.astype(jnp.bfloat16)   # MXU-native, halves weight DMA
        prepped[f"b{i}"] = b                        # biases stay fp32
    return prepped


# ---------------------------------------------------------------------------
# Wrapper
# ---------------------------------------------------------------------------
@functools.partial(jax.jit, static_argnames=("action_size",))
def qnetwork_forward(state, prepped, action_size):
    """Runs the fused QNetwork forward pass via pallas_call.

    Args:
      state:   [batch, state_size] float32
      prepped: output of prepare_params (bf16 weights, fp32 biases, padded fc5)
      action_size: true (unpadded) number of actions
    Returns:
      [batch, action_size] float32 Q-values.
    """
    batch, state_size = state.shape
    out_pad = prepped["w5"].shape[1]

    tb, b_pad = _choose_tiling(batch)
    if b_pad != batch:
        state = jnp.pad(state, ((0, b_pad - batch), (0, 0)))

    operands = (
        state,
        prepped["w1"], prepped["b1"],
        prepped["w2"], prepped["b2"],
        prepped["w3"], prepped["b3"],
        prepped["w4"], prepped["b4"],
        prepped["w5"], prepped["b5"],
    )

    # State / output tiled over the batch grid axis; weights & biases use a
    # constant index_map so their blocks never change across grid steps and
    # thus are DMA'd into VMEM once and stay resident.
    in_specs = [pl.BlockSpec((tb, state_size), lambda i: (i, 0))]
    for op in operands[1:]:
        in_specs.append(pl.BlockSpec(op.shape, lambda i: (0, 0)))
    out_specs = pl.BlockSpec((tb, out_pad), lambda i: (i, 0))

    f1 = prepped["w1"].shape[1]
    f2 = prepped["w2"].shape[1]
    f3 = prepped["w3"].shape[1]
    f4 = prepped["w4"].shape[1]
    flops = 2 * b_pad * (state_size * f1 + f1 * f2 + f2 * f3 + f3 * f4 + f4 * out_pad)
    bytes_accessed = (
        sum(int(op.size) * op.dtype.itemsize for op in operands)
        + b_pad * out_pad * 4
    )

    out = pl.pallas_call(
        _qnet_kernel,
        out_shape=jax.ShapeDtypeStruct((b_pad, out_pad), jnp.float32),
        grid=(b_pad // tb,),
        in_specs=in_specs,
        out_specs=out_specs,
        compiler_params=pltpu.CompilerParams(
            dimension_semantics=("parallel",)),
        cost_estimate=pl.CostEstimate(
            flops=flops, transcendentals=0, bytes_accessed=bytes_accessed),
    )(*operands)

    return out[:batch, :action_size]


# ---------------------------------------------------------------------------
# Init + references
# ---------------------------------------------------------------------------
def init_qnetwork_params(key, state_size, action_size,
                         fc1=256, fc2=256, fc3=256, fc4=256):
    """Deterministic init mirroring torch.nn.Linear default (U(-1/sqrt(fan_in), +))."""
    sizes = [(state_size, fc1), (fc1, fc2), (fc2, fc3), (fc3, fc4), (fc4, action_size)]
    params = {}
    for idx, (fan_in, fan_out) in enumerate(sizes, start=1):
        key, kw, kb = jax.random.split(key, 3)
        bound = 1.0 / jnp.sqrt(jnp.float32(fan_in))
        # Stored as [in, out] (transpose of torch's [out, in]) so y = x @ W.
        params[f"w{idx}"] = jax.random.uniform(
            kw, (fan_in, fan_out), jnp.float32, minval=-bound, maxval=bound)
        params[f"b{idx}"] = jax.random.uniform(
            kb, (1, fan_out), jnp.float32, minval=-bound, maxval=bound)
    return params


def _reference_bf16(state, prepped, action_size):
    """Pure-JAX reference mirroring the kernel's dtype choices (bf16 in, fp32 acc)."""
    h = state.astype(jnp.bfloat16)
    for i in range(1, 5):
        y = jnp.dot(h, prepped[f"w{i}"], preferred_element_type=jnp.float32)
        h = jnp.maximum(y + prepped[f"b{i}"], 0.0).astype(jnp.bfloat16)
    out = jnp.dot(h, prepped["w5"], preferred_element_type=jnp.float32) + prepped["b5"]
    return out[:, :action_size]


def _reference_fp32(state, params):
    """True fp32 reference matching the PyTorch QNetwork forward."""
    h = state
    for i in range(1, 5):
        y = jnp.dot(h, params[f"w{i}"], precision=jax.lax.Precision.HIGHEST)
        h = jnp.maximum(y + params[f"b{i}"], 0.0)
    return jnp.dot(h, params["w5"],
                   precision=jax.lax.Precision.HIGHEST) + params["b5"]


if __name__ == "__main__":
    key = jax.random.PRNGKey(0)
    k_params, k_state_small, k_state_big = jax.random.split(key, 3)

    state_size = 16
    action_size = 4

    params = init_qnetwork_params(k_params, state_size, action_size)
    prepped = prepare_params(params)   # cast/pad once, outside the hot path

    # --- small (actor-style) batch: single grid step ---
    batch_small = 8
    state_small = jax.random.normal(k_state_small, (batch_small, state_size), jnp.float32)
    q_small = jax.block_until_ready(qnetwork_forward(state_small, prepped, action_size))
    assert q_small.shape == (batch_small, action_size)
    assert jnp.allclose(q_small, _reference_bf16(state_small, prepped, action_size),
                        atol=1e-2, rtol=1e-2), "small batch: mismatch vs bf16 reference"
    assert jnp.allclose(q_small, _reference_fp32(state_small, params),
                        atol=5e-2, rtol=5e-2), "small batch: mismatch vs fp32 reference"

    # --- larger batch: exercises the multi-step (>=2, even) grid path ---
    batch_big = 64
    state_big = jax.random.normal(k_state_big, (batch_big, state_size), jnp.float32)
    q_big = jax.block_until_ready(qnetwork_forward(state_big, prepped, action_size))
    assert q_big.shape == (batch_big, action_size)
    assert jnp.allclose(q_big, _reference_bf16(state_big, prepped, action_size),
                        atol=1e-2, rtol=1e-2), "big batch: mismatch vs bf16 reference"
    assert jnp.allclose(q_big, _reference_fp32(state_big, params),
                        atol=5e-2, rtol=5e-2), "big batch: mismatch vs fp32 reference"

    print("KERNEL_OK")
</pallas_src>

<mosaic_0001>
module attributes {stable_mosaic.version = 11 : i64} {
  func.func @_qnet_kernel(%arg0: i32, %arg1: memref<8x16xf32, #tpu.memory_space<vmem>>, %arg2: memref<16x256xbf16, #tpu.memory_space<vmem>>, %arg3: memref<1x256xf32, #tpu.memory_space<vmem>>, %arg4: memref<256x256xbf16, #tpu.memory_space<vmem>>, %arg5: memref<1x256xf32, #tpu.memory_space<vmem>>, %arg6: memref<256x256xbf16, #tpu.memory_space<vmem>>, %arg7: memref<1x256xf32, #tpu.memory_space<vmem>>, %arg8: memref<256x256xbf16, #tpu.memory_space<vmem>>, %arg9: memref<1x256xf32, #tpu.memory_space<vmem>>, %arg10: memref<256x128xbf16, #tpu.memory_space<vmem>>, %arg11: memref<1x128xf32, #tpu.memory_space<vmem>>, %arg12: memref<8x128xf32, #tpu.memory_space<vmem>>) attributes {dimension_semantics = [#tpu.dimension_semantics<parallel>], iteration_bounds = array<i64: 1>, scalar_prefetch = 0 : i64, scratch_operands = 0 : i64, tpu.core_type = #tpu.core_type<tc>, window_params = [{transform_indices = @transform_0, window_bounds = array<i64: 8, 16>}, {pipeline_mode = #tpu.pipeline_mode<synchronous>, transform_indices = @transform_1, window_bounds = array<i64: 16, 256>}, {pipeline_mode = #tpu.pipeline_mode<synchronous>, transform_indices = @transform_2, window_bounds = array<i64: 1, 256>}, {pipeline_mode = #tpu.pipeline_mode<synchronous>, transform_indices = @transform_3, window_bounds = array<i64: 256, 256>}, {pipeline_mode = #tpu.pipeline_mode<synchronous>, transform_indices = @transform_4, window_bounds = array<i64: 1, 256>}, {pipeline_mode = #tpu.pipeline_mode<synchronous>, transform_indices = @transform_5, window_bounds = array<i64: 256, 256>}, {pipeline_mode = #tpu.pipeline_mode<synchronous>, transform_indices = @transform_6, window_bounds = array<i64: 1, 256>}, {pipeline_mode = #tpu.pipeline_mode<synchronous>, transform_indices = @transform_7, window_bounds = array<i64: 256, 256>}, {pipeline_mode = #tpu.pipeline_mode<synchronous>, transform_indices = @transform_8, window_bounds = array<i64: 1, 256>}, {pipeline_mode = #tpu.pipeline_mode<synchronous>, transform_indices = @transform_9, window_bounds = array<i64: 256, 128>}, {pipeline_mode = #tpu.pipeline_mode<synchronous>, transform_indices = @transform_10, window_bounds = array<i64: 1, 128>}, {transform_indices = @transform_11, window_bounds = array<i64: 8, 128>}]} {
    %c0 = arith.constant 0 : index
    %c0_0 = arith.constant 0 : index
    %0 = vector.load %arg1[%c0, %c0_0] : memref<8x16xf32, #tpu.memory_space<vmem>>, vector<8x16xf32>
    %1 = arith.truncf %0 : vector<8x16xf32> to vector<8x16xbf16>
    %c0_1 = arith.constant 0 : index
    %c0_2 = arith.constant 0 : index
    %2 = vector.load %arg2[%c0_1, %c0_2] : memref<16x256xbf16, #tpu.memory_space<vmem>>, vector<16x256xbf16>
    %cst = arith.constant dense<0.000000e+00> : vector<8x256xf32>
    %3 = tpu.matmul %1, %2, %cst {dimension_numbers = #tpu.dot_dimension_numbers<[1], [0], [0], [1], [0, 0, 1, 1], [], []>} : vector<8x16xbf16>, vector<16x256xbf16>, vector<8x256xf32> -> vector<8x256xf32>
    %c0_3 = arith.constant 0 : index
    %c0_4 = arith.constant 0 : index
    %4 = vector.load %arg3[%c0_3, %c0_4] : memref<1x256xf32, #tpu.memory_space<vmem>>, vector<1x256xf32>
    %5 = vector.broadcast %4 : vector<1x256xf32> to vector<8x256xf32>
    %6 = arith.addf %3, %5 : vector<8x256xf32>
    %cst_5 = arith.constant 0.000000e+00 : f32
    %7 = vector.broadcast %cst_5 : f32 to vector<8x256xf32>
    %8 = arith.maximumf %6, %7 : vector<8x256xf32>
    %9 = arith.truncf %8 : vector<8x256xf32> to vector<8x256xbf16>
    %c0_6 = arith.constant 0 : index
    %c0_7 = arith.constant 0 : index
    %10 = vector.load %arg4[%c0_6, %c0_7] : memref<256x256xbf16, #tpu.memory_space<vmem>>, vector<256x256xbf16>
    %cst_8 = arith.constant dense<0.000000e+00> : vector<8x256xf32>
    %11 = tpu.matmul %9, %10, %cst_8 {dimension_numbers = #tpu.dot_dimension_numbers<[1], [0], [0], [1], [0, 0, 1, 1], [], []>} : vector<8x256xbf16>, vector<256x256xbf16>, vector<8x256xf32> -> vector<8x256xf32>
    %c0_9 = arith.constant 0 : index
    %c0_10 = arith.constant 0 : index
    %12 = vector.load %arg5[%c0_9, %c0_10] : memref<1x256xf32, #tpu.memory_space<vmem>>, vector<1x256xf32>
    %13 = vector.broadcast %12 : vector<1x256xf32> to vector<8x256xf32>
    %14 = arith.addf %11, %13 : vector<8x256xf32>
    %cst_11 = arith.constant 0.000000e+00 : f32
    %15 = vector.broadcast %cst_11 : f32 to vector<8x256xf32>
    %16 = arith.maximumf %14, %15 : vector<8x256xf32>
    %17 = arith.truncf %16 : vector<8x256xf32> to vector<8x256xbf16>
    %c0_12 = arith.constant 0 : index
    %c0_13 = arith.constant 0 : index
    %18 = vector.load %arg6[%c0_12, %c0_13] : memref<256x256xbf16, #tpu.memory_space<vmem>>, vector<256x256xbf16>
    %cst_14 = arith.constant dense<0.000000e+00> : vector<8x256xf32>
    %19 = tpu.matmul %17, %18, %cst_14 {dimension_numbers = #tpu.dot_dimension_numbers<[1], [0], [0], [1], [0, 0, 1, 1], [], []>} : vector<8x256xbf16>, vector<256x256xbf16>, vector<8x256xf32> -> vector<8x256xf32>
    %c0_15 = arith.constant 0 : index
    %c0_16 = arith.constant 0 : index
    %20 = vector.load %arg7[%c0_15, %c0_16] : memref<1x256xf32, #tpu.memory_space<vmem>>, vector<1x256xf32>
    %21 = vector.broadcast %20 : vector<1x256xf32> to vector<8x256xf32>
    %22 = arith.addf %19, %21 : vector<8x256xf32>
    %cst_17 = arith.constant 0.000000e+00 : f32
    %23 = vector.broadcast %cst_17 : f32 to vector<8x256xf32>
    %24 = arith.maximumf %22, %23 : vector<8x256xf32>
    %25 = arith.truncf %24 : vector<8x256xf32> to vector<8x256xbf16>
    %c0_18 = arith.constant 0 : index
    %c0_19 = arith.constant 0 : index
    %26 = vector.load %arg8[%c0_18, %c0_19] : memref<256x256xbf16, #tpu.memory_space<vmem>>, vector<256x256xbf16>
    %cst_20 = arith.constant dense<0.000000e+00> : vector<8x256xf32>
    %27 = tpu.matmul %25, %26, %cst_20 {dimension_numbers = #tpu.dot_dimension_numbers<[1], [0], [0], [1], [0, 0, 1, 1], [], []>} : vector<8x256xbf16>, vector<256x256xbf16>, vector<8x256xf32> -> vector<8x256xf32>
    %c0_21 = arith.constant 0 : index
    %c0_22 = arith.constant 0 : index
    %28 = vector.load %arg9[%c0_21, %c0_22] : memref<1x256xf32, #tpu.memory_space<vmem>>, vector<1x256xf32>
    %29 = vector.broadcast %28 : vector<1x256xf32> to vector<8x256xf32>
    %30 = arith.addf %27, %29 : vector<8x256xf32>
    %cst_23 = arith.constant 0.000000e+00 : f32
    %31 = vector.broadcast %cst_23 : f32 to vector<8x256xf32>
    %32 = arith.maximumf %30, %31 : vector<8x256xf32>
    %33 = arith.truncf %32 : vector<8x256xf32> to vector<8x256xbf16>
    %c0_24 = arith.constant 0 : index
    %c0_25 = arith.constant 0 : index
    %34 = vector.load %arg10[%c0_24, %c0_25] : memref<256x128xbf16, #tpu.memory_space<vmem>>, vector<256x128xbf16>
    %cst_26 = arith.constant dense<0.000000e+00> : vector<8x128xf32>
    %35 = tpu.matmul %33, %34, %cst_26 {dimension_numbers = #tpu.dot_dimension_numbers<[1], [0], [0], [1], [0, 0, 1, 1], [], []>} : vector<8x256xbf16>, vector<256x128xbf16>, vector<8x128xf32> -> vector<8x128xf32>
    %c0_27 = arith.constant 0 : index
    %c0_28 = arith.constant 0 : index
    %36 = vector.load %arg11[%c0_27, %c0_28] : memref<1x128xf32, #tpu.memory_space<vmem>>, vector<1x128xf32>
    %37 = vector.broadcast %36 : vector<1x128xf32> to vector<8x128xf32>
    %38 = arith.addf %35, %37 : vector<8x128xf32>
    %c0_29 = arith.constant 0 : index
    %c0_30 = arith.constant 0 : index
    %39 = vector.load %arg12[%c0_29, %c0_30] : memref<8x128xf32, #tpu.memory_space<vmem>>, vector<8x128xf32>
    tpu.vector_store %arg12[%c0_29, %c0_30], %38 {strides = array<i32>} : memref<8x128xf32, #tpu.memory_space<vmem>>, vector<8x128xf32>,
    return
  }
  func.func @transform_0(%arg0: i32) -> (i32, i32) {
    %c0_i32 = arith.constant 0 : i32
    %c0_i32_0 = arith.constant 0 : i32
    return %arg0, %c0_i32 : i32, i32
  }
  func.func @transform_1(%arg0: i32) -> (i32, i32) {
    %c0_i32 = arith.constant 0 : i32
    %c0_i32_0 = arith.constant 0 : i32
    %c0_i32_1 = arith.constant 0 : i32
    return %c0_i32, %c0_i32_0 : i32, i32
  }
  func.func @transform_2(%arg0: i32) -> (i32, i32) {
    %c0_i32 = arith.constant 0 : i32
    %c0_i32_0 = arith.constant 0 : i32
    %c0_i32_1 = arith.constant 0 : i32
    return %c0_i32, %c0_i32_0 : i32, i32
  }
  func.func @transform_3(%arg0: i32) -> (i32, i32) {
    %c0_i32 = arith.constant 0 : i32
    %c0_i32_0 = arith.constant 0 : i32
    %c0_i32_1 = arith.constant 0 : i32
    return %c0_i32, %c0_i32_0 : i32, i32
  }
  func.func @transform_4(%arg0: i32) -> (i32, i32) {
    %c0_i32 = arith.constant 0 : i32
    %c0_i32_0 = arith.constant 0 : i32
    %c0_i32_1 = arith.constant 0 : i32
    return %c0_i32, %c0_i32_0 : i32, i32
  }
  func.func @transform_5(%arg0: i32) -> (i32, i32) {
    %c0_i32 = arith.constant 0 : i32
    %c0_i32_0 = arith.constant 0 : i32
    %c0_i32_1 = arith.constant 0 : i32
    return %c0_i32, %c0_i32_0 : i32, i32
  }
  func.func @transform_6(%arg0: i32) -> (i32, i32) {
    %c0_i32 = arith.constant 0 : i32
    %c0_i32_0 = arith.constant 0 : i32
    %c0_i32_1 = arith.constant 0 : i32
    return %c0_i32, %c0_i32_0 : i32, i32
  }
  func.func @transform_7(%arg0: i32) -> (i32, i32) {
    %c0_i32 = arith.constant 0 : i32
    %c0_i32_0 = arith.constant 0 : i32
    %c0_i32_1 = arith.constant 0 : i32
    return %c0_i32, %c0_i32_0 : i32, i32
  }
  func.func @transform_8(%arg0: i32) -> (i32, i32) {
    %c0_i32 = arith.constant 0 : i32
    %c0_i32_0 = arith.constant 0 : i32
    %c0_i32_1 = arith.constant 0 : i32
    return %c0_i32, %c0_i32_0 : i32, i32
  }
  func.func @transform_9(%arg0: i32) -> (i32, i32) {
    %c0_i32 = arith.constant 0 : i32
    %c0_i32_0 = arith.constant 0 : i32
    %c0_i32_1 = arith.constant 0 : i32
    return %c0_i32, %c0_i32_0 : i32, i32
  }
  func.func @transform_10(%arg0: i32) -> (i32, i32) {
    %c0_i32 = arith.constant 0 : i32
    %c0_i32_0 = arith.constant 0 : i32
    %c0_i32_1 = arith.constant 0 : i32
    return %c0_i32, %c0_i32_0 : i32, i32
  }
  func.func @transform_11(%arg0: i32) -> (i32, i32) {
    %c0_i32 = arith.constant 0 : i32
    %c0_i32_0 = arith.constant 0 : i32
    return %arg0, %c0_i32 : i32, i32
  }
}

</mosaic_0001>

<llo_original>
// kernel: qnetwork_forward.1
$region0: #{qnetwork_forward.1}
  #allocation0 [shape = 'u32[]', space=smem, size = 0x4, offset = 0x4, fixed_abs, tag = 'smem constant byte address 0x4 - core index']
  #allocation1 [shape = 'u32[144,128]{1,0:T(1,128)}', space=vmem, size = 0x12000, scoped, tag = 'internal scratch']
  %s0 = inlined_call_operand.hbm [shape: f32[8,16], index: 0, kind: input, shape index: {}]
  %s1 = inlined_call_operand.vmem [shape: bf16[16,256], index: 1, kind: input, shape index: {}]
  %s2 = inlined_call_operand.vmem [shape: f32[1,256], index: 2, kind: input, shape index: {}]
  %s3 = inlined_call_operand.hbm [shape: bf16[256,256], index: 3, kind: input, shape index: {}]
  %s4 = inlined_call_operand.vmem [shape: f32[1,256], index: 4, kind: input, shape index: {}]
  %s5 = inlined_call_operand.hbm [shape: bf16[256,256], index: 5, kind: input, shape index: {}]
  %s6 = inlined_call_operand.vmem [shape: f32[1,256], index: 6, kind: input, shape index: {}]
  %s7 = inlined_call_operand.hbm [shape: bf16[256,256], index: 7, kind: input, shape index: {}]
  %s8 = inlined_call_operand.hbm [shape: f32[1,256], index: 8, kind: input, shape index: {}]
  %s9 = inlined_call_operand.hbm [shape: bf16[256,128], index: 9, kind: input, shape index: {}]
  %s10 = inlined_call_operand.hbm [shape: f32[1,128], index: 10, kind: input, shape index: {}]
  %s11 = inlined_call_operand.vmem [shape: f32[8,128], index: 11, kind: output, shape index: {}]
  %s12 = sld [smem:[#allocation0]]
  $region82: #{qnetwork_forward.1} parent=0
    _
  %s14 = ssub.s32 1, %s12
  %s15 = scalar_select 0, %s14, %s12
  $region1: #{qnetwork_forward.1} parent=0
    #allocation2 [shape = 'u8[4096]{0}', space=vmem, size = 0x1000, scoped, tag = 'input window, operand 0, single buffered']
    #allocation3 [shape = 's32[1]{0}', space=sflag, size = 0x4, scoped, tag = 'scoped memory for qnetwork_forward.1']
    #allocation4 [shape = 'u8[131072]{0}', space=vmem, size = 0x20000, scoped, tag = 'input window, operand 3, single buffered']
    #allocation5 [shape = 's32[1]{0}', space=sflag, size = 0x4, scoped, tag = 'scoped memory for qnetwork_forward.1']
    #allocation6 [shape = 'u8[131072]{0}', space=vmem, size = 0x20000, scoped, tag = 'input window, operand 5, single buffered']
    #allocation7 [shape = 'u8[131072]{0}', space=vmem, size = 0x20000, scoped, tag = 'input window, operand 7, single buffered']
    #allocation8 [shape = 's32[1]{0}', space=sflag, size = 0x4, scoped, tag = 'scoped memory for qnetwork_forward.1']
    #allocation9 [shape = 'u8[1024]{0}', space=vmem, size = 0x400, scoped, tag = 'input window, operand 8, single buffered']
    #allocation10 [shape = 'u8[65536]{0}', space=vmem, size = 0x10000, scoped, tag = 'input window, operand 9, single buffered']
    #allocation11 [shape = 's32[1]{0}', space=sflag, size = 0x4, scoped, tag = 'scoped memory for qnetwork_forward.1']
    #allocation12 [shape = 'u8[512]{0}', space=vmem, size = 0x400, scoped, tag = 'input window, operand 10, single buffered']
    %16 = vsyncpa [#allocation3], 0
    %17 = vsyncpa [#allocation5], 0
    %18 = vsyncpa [#allocation8], 0
    %19 = vsyncpa [#allocation11], 0
    // Predicated region
    $region2: #{qnetwork_forward.1} parent=1 // pred_check
      _
    $region3: #{qnetwork_forward.1} parent=1 // pred_check_branch
      %21 = sbr.rel (0) target = $region5
    $region4: #{qnetwork_forward.1} parent=1 // pred_region
      %s23 = ssub.s32 128, 128
      %24 = vsyncadd [#allocation3], %s23
      %s26 = sshll.u32 [#allocation2], 4
      %s27 = int_to_ptr.vmem [resolvable:$true] %s26
      %29 = dma.hbm_to_vmem [thread:$0]  %s0, 128, %s27, [#allocation3]
    $region5: #{qnetwork_forward.1} parent=1 // pred_fallthru
      _
    // Predicated region
    $region6: #{qnetwork_forward.1} parent=1 // pred_check
      _
    $region7: #{qnetwork_forward.1} parent=1 // pred_check_branch
      %31 = sbr.rel (0) target = $region9
    $region8: #{qnetwork_forward.1} parent=1 // pred_region
      _
    $region9: #{qnetwork_forward.1} parent=1 // pred_fallthru
      _
    // Predicated region
    $region10: #{qnetwork_forward.1} parent=1 // pred_check
      _
    $region11: #{qnetwork_forward.1} parent=1 // pred_check_branch
      %33 = sbr.rel (0) target = $region13
    $region12: #{qnetwork_forward.1} parent=1 // pred_region
      _
    $region13: #{qnetwork_forward.1} parent=1 // pred_fallthru
      _
    // Predicated region
    $region14: #{qnetwork_forward.1} parent=1 // pred_check
      _
    $region15: #{qnetwork_forward.1} parent=1 // pred_check_branch
      %35 = sbr.rel (0) target = $region17
    $region16: #{qnetwork_forward.1} parent=1 // pred_region
      %s37 = ssub.s32 4096, 4096
      %38 = vsyncadd [#allocation5], %s37
      %s39 = sshll.u32 [#allocation4], 4
      %s40 = int_to_ptr.vmem [resolvable:$true] %s39
      %45 = dma.hbm_to_vmem [thread:$0]  %s3, 4096, %s40, [#allocation5], 128, 128, 8
    $region17: #{qnetwork_forward.1} parent=1 // pred_fallthru
      _
    // Predicated region
    $region18: #{qnetwork_forward.1} parent=1 // pred_check
      _
    $region19: #{qnetwork_forward.1} parent=1 // pred_check_branch
      %47 = sbr.rel (0) target = $region21
    $region20: #{qnetwork_forward.1} parent=1 // pred_region
      _
    $region21: #{qnetwork_forward.1} parent=1 // pred_fallthru
      _
    // Predicated region
    $region22: #{qnetwork_forward.1} parent=1 // pred_check
      _
    $region23: #{qnetwork_forward.1} parent=1 // pred_check_branch
      %49 = sbr.rel (0) target = $region25
    $region24: #{qnetwork_forward.1} parent=1 // pred_region
      %s51 = ssub.s32 4096, 4096
      %52 = vsyncadd [#allocation5], %s51
      %s53 = sshll.u32 [#allocation6], 4
      %s54 = int_to_ptr.vmem [resolvable:$true] %s53
      %59 = dma.hbm_to_vmem [thread:$0]  %s5, 4096, %s54, [#allocation5], 128, 128, 8
    $region25: #{qnetwork_forward.1} parent=1 // pred_fallthru
      _
    // Predicated region
    $region26: #{qnetwork_forward.1} parent=1 // pred_check
      _
    $region27: #{qnetwork_forward.1} parent=1 // pred_check_branch
      %61 = sbr.rel (0) target = $region29
    $region28: #{qnetwork_forward.1} parent=1 // pred_region
      _
    $region29: #{qnetwork_forward.1} parent=1 // pred_fallthru
      _
    // Predicated region
    $region30: #{qnetwork_forward.1} parent=1 // pred_check
      _
    $region31: #{qnetwork_forward.1} parent=1 // pred_check_branch
      %63 = sbr.rel (0) target = $region33
    $region32: #{qnetwork_forward.1} parent=1 // pred_region
      %s65 = ssub.s32 4096, 4096
      %66 = vsyncadd [#allocation8], %s65
      %s67 = sshll.u32 [#allocation7], 4
      %s68 = int_to_ptr.vmem [resolvable:$true] %s67
      %73 = dma.hbm_to_vmem [thread:$0]  %s7, 4096, %s68, [#allocation8], 128, 128, 8
    $region33: #{qnetwork_forward.1} parent=1 // pred_fallthru
      _
    // Predicated region
    $region34: #{qnetwork_forward.1} parent=1 // pred_check
      _
    $region35: #{qnetwork_forward.1} parent=1 // pred_check_branch
      %75 = sbr.rel (0) target = $region37
    $region36: #{qnetwork_forward.1} parent=1 // pred_region
      %s77 = ssub.s32 32, 32
      %78 = vsyncadd [#allocation8], %s77
      %s80 = sshll.u32 [#allocation9], 4
      %s81 = int_to_ptr.vmem [resolvable:$true] %s80
      %83 = dma.hbm_to_vmem [thread:$0]  %s8, 32, %s81, [#allocation8]
    $region37: #{qnetwork_forward.1} parent=1 // pred_fallthru
      _
    // Predicated region
    $region38: #{qnetwork_forward.1} parent=1 // pred_check
      _
    $region39: #{qnetwork_forward.1} parent=1 // pred_check_branch
      %85 = sbr.rel (0) target = $region41
    $region40: #{qnetwork_forward.1} parent=1 // pred_region
      %s87 = ssub.s32 2048, 2048
      %88 = vsyncadd [#allocation11], %s87
      %s89 = sshll.u32 [#allocation10], 4
      %s90 = int_to_ptr.vmem [resolvable:$true] %s89
      %95 = dma.hbm_to_vmem [thread:$0]  %s9, 2048, %s90, [#allocation11], 64, 64, 4
    $region41: #{qnetwork_forward.1} parent=1 // pred_fallthru
      _
    // Predicated region
    $region42: #{qnetwork_forward.1} parent=1 // pred_check
      _
    $region43: #{qnetwork_forward.1} parent=1 // pred_check_branch
      %97 = sbr.rel (0) target = $region45
    $region44: #{qnetwork_forward.1} parent=1 // pred_region
      %s99 = ssub.s32 16, 16
      %100 = vsyncadd [#allocation11], %s99
      %s102 = sshll.u32 [#allocation12], 4
      %s103 = int_to_ptr.vmem [resolvable:$true] %s102
      %105 = dma.hbm_to_vmem [thread:$0]  %s10, 16, %s103, [#allocation11]
    $region45: #{qnetwork_forward.1} parent=1 // pred_fallthru
      _
    // Predicated region
    $region46: #{qnetwork_forward.1} parent=1 // pred_check
      _
    $region47: #{qnetwork_forward.1} parent=1 // pred_check_branch
      %107 = sbr.rel (0) target = $region49
    $region48: #{qnetwork_forward.1} parent=1 // pred_region
      %108 = dma.done [#allocation3], 128
    $region49: #{qnetwork_forward.1} parent=1 // pred_fallthru
      _
    // Predicated region
    $region50: #{qnetwork_forward.1} parent=1 // pred_check
      _
    $region51: #{qnetwork_forward.1} parent=1 // pred_check_branch
      %110 = sbr.rel (0) target = $region53
    $region52: #{qnetwork_forward.1} parent=1 // pred_region
      %111 = dma.done [#allocation5], 4096
    $region53: #{qnetwork_forward.1} parent=1 // pred_fallthru
      _
    // Predicated region
    $region54: #{qnetwork_forward.1} parent=1 // pred_check
      _
    $region55: #{qnetwork_forward.1} parent=1 // pred_check_branch
      %113 = sbr.rel (0) target = $region57
    $region56: #{qnetwork_forward.1} parent=1 // pred_region
      %114 = dma.done [#allocation5], 4096
    $region57: #{qnetwork_forward.1} parent=1 // pred_fallthru
      _
    // Predicated region
    $region58: #{qnetwork_forward.1} parent=1 // pred_check
      _
    $region59: #{qnetwork_forward.1} parent=1 // pred_check_branch
      %116 = sbr.rel (0) target = $region61
    $region60: #{qnetwork_forward.1} parent=1 // pred_region
      %117 = dma.done [#allocation8], 4096
    $region61: #{qnetwork_forward.1} parent=1 // pred_fallthru
      _
    // Predicated region
    $region62: #{qnetwork_forward.1} parent=1 // pred_check
      _
    $region63: #{qnetwork_forward.1} parent=1 // pred_check_branch
      %119 = sbr.rel (0) target = $region65
    $region64: #{qnetwork_forward.1} parent=1 // pred_region
      %120 = dma.done [#allocation8], 32
    $region65: #{qnetwork_forward.1} parent=1 // pred_fallthru
      _
    // Predicated region
    $region66: #{qnetwork_forward.1} parent=1 // pred_check
      _
    $region67: #{qnetwork_forward.1} parent=1 // pred_check_branch
      %122 = sbr.rel (0) target = $region69
    $region68: #{qnetwork_forward.1} parent=1 // pred_region
      %123 = dma.done [#allocation11], 2048
    $region69: #{qnetwork_forward.1} parent=1 // pred_fallthru
      _
    // Predicated region
    $region70: #{qnetwork_forward.1} parent=1 // pred_check
      _
    $region71: #{qnetwork_forward.1} parent=1 // pred_check_branch
      %125 = sbr.rel (0) target = $region73
    $region72: #{qnetwork_forward.1} parent=1 // pred_region
      %126 = dma.done [#allocation11], 16
    $region73: #{qnetwork_forward.1} parent=1 // pred_fallthru
      _
    %v128 = vld [vmem:[#allocation2] sm:$0xff]
    %v129 = vpack.c.bf16 %v128, %v128
    %v130 = vld [vmem:[%s1] sm:$0xff]
    %v131 = vld [vmem:[%s1 + $0x8] sm:$0xff]
    %v132 = vld [vmem:[%s2] sm:$0x3]
    %v134 = vlaneseq
    %v135 = vshrl.u32 %v134, 7
    %v136 = vsub.s32 0, %v135
    %v137 = vrot.slane %v132, %v136
    %v138 = vlaneseq
    %v139 = vshrl.u32 %v138, 7
    %v140 = vsub.s32 1, %v139
    %v141 = vrot.slane %v132, %v140
    %v146 = vunpack.c.l.b16 %v130
    %v147 = vunpack.c.h.b16 %v130
    %v148 = vunpack.c.l.b16 %v131
    %v149 = vunpack.c.h.b16 %v131
    %v150 = vpack.c.b16 %v148, %v146
    %v151 = vpack.c.b16 %v149, %v147
    %vm154 = vcmask 130048
    %v156 = vsel %vm154, %v129, 0
    %158 = vmatprep.subr.bf16.mxu0 %v151
    %159 = vmatpush1.bf16.msra.mxu0 %v150
    %160 = vmatprep.subr.bf16.mxu0 0
    %161 = vmatpush1.bf16.msra.mxu0 0
    %162 = vmatprep.subr.bf16.mxu0 0
    %163 = vmatpush1.bf16.msra.mxu0 0
    %164 = vmatprep.subr.bf16.mxu0 0
    %165 = vmatpush1.bf16.msra.mxu0 0
    %166 = vmatprep.subr.bf16.mxu0 0
    %167 = vmatpush1.bf16.msra.mxu0 0
    %168 = vmatprep.subr.bf16.mxu0 0
    %169 = vmatpush1.bf16.msra.mxu0 0
    %170 = vmatprep.subr.bf16.mxu0 0
    %171 = vmatpush1.bf16.msra.mxu0 0
    %172 = vmatprep.subr.bf16.mxu0 0
    %173 = vmatpush1.bf16.msra.mxu0 0
    %174 = vmatprep.subr.bf16.mxu0 0
    %175 = vmatpush1.bf16.msra.mxu0 0
    %176 = vmatprep.subr.bf16.mxu0 0
    %177 = vmatpush1.bf16.msra.mxu0 0
    %178 = vmatprep.subr.bf16.mxu0 0
    %179 = vmatpush1.bf16.msra.mxu0 0
    %180 = vmatprep.subr.bf16.mxu0 0
    %181 = vmatpush1.bf16.msra.mxu0 0
    %182 = vmatprep.subr.bf16.mxu0 0
    %183 = vmatpush1.bf16.msra.mxu0 0
    %184 = vmatprep.subr.bf16.mxu0 0
    %185 = vmatpush1.bf16.msra.mxu0 0
    %186 = vmatprep.subr.bf16.mxu0 0
    %187 = vmatpush1.bf16.msra.mxu0 0
    %188 = vmatprep.subr.bf16.mxu0 0
    %189 = vmatpush1.bf16.msra.mxu0 0
    %190 = vmatprep.mubr.bf16.mxu0 0
    %191 = vmatmul.mubr.bf16.gmra.mrb[0].mxu0 %v156
    %v192 = vpop.f32.mrb[0].mxu0
    %v193 = vadd.f32 %v137, %v192
    %v194 = vpop.f32.mrb[0].mxu0
    %v195 = vadd.f32 %v141, %v194
    %v196 = vpop.f32.mrb[0].mxu0
    %v197 = vpop.f32.mrb[0].mxu0
    %198 = vdwg.mxu0
    %v199 = vmax.f32 %v193, 0.0
    %v200 = vmax.f32 %v195, 0.0
    %v201 = vpack.c.bf16 %v199, %v199
    %v202 = vpack.c.bf16 %v200, %v200
    %v203 = vld [vmem:[#allocation4] sm:$0xff]
    %v204 = vld [vmem:[#allocation4 + $0x8] sm:$0xff]
    %v205 = vld [vmem:[#allocation4 + $0x10] sm:$0xff]
    %v206 = vld [vmem:[#allocation4 + $0x18] sm:$0xff]
    %v207 = vld [vmem:[#allocation4 + $0x20] sm:$0xff]
    %v208 = vld [vmem:[#allocation4 + $0x28] sm:$0xff]
    %v209 = vld [vmem:[#allocation4 + $0x30] sm:$0xff]
    %v210 = vld [vmem:[#allocation4 + $0x38] sm:$0xff]
    %v211 = vld [vmem:[#allocation4 + $0x40] sm:$0xff]
    %v212 = vld [vmem:[#allocation4 + $0x48] sm:$0xff]
    %v213 = vld [vmem:[#allocation4 + $0x50] sm:$0xff]
    %v214 = vld [vmem:[#allocation4 + $0x58] sm:$0xff]
    %v215 = vld [vmem:[#allocation4 + $0x60] sm:$0xff]
    %v216 = vld [vmem:[#allocation4 + $0x68] sm:$0xff]
    %v217 = vld [vmem:[#allocation4 + $0x70] sm:$0xff]
    %v218 = vld [vmem:[#allocation4 + $0x78] sm:$0xff]
    %v219 = vld [vmem:[#allocation4 + $0x80] sm:$0xff]
    %v220 = vld [vmem:[#allocation4 + $0x88] sm:$0xff]
    %v221 = vld [vmem:[#allocation4 + $0x90] sm:$0xff]
    %v222 = vld [vmem:[#allocation4 + $0x98] sm:$0xff]
    %v223 = vld [vmem:[#allocation4 + $0xa0] sm:$0xff]
    %v224 = vld [vmem:[#allocation4 + $0xa8] sm:$0xff]
    %v225 = vld [vmem:[#allocation4 + $0xb0] sm:$0xff]
    %v226 = vld [vmem:[#allocation4 + $0xb8] sm:$0xff]
    %v227 = vld [vmem:[#allocation4 + $0xc0] sm:$0xff]
    %v228 = vld [vmem:[#allocation4 + $0xc8] sm:$0xff]
    %v229 = vld [vmem:[#allocation4 + $0xd0] sm:$0xff]
    %v230 = vld [vmem:[#allocation4 + $0xd8] sm:$0xff]
    %v231 = vld [vmem:[#allocation4 + $0xe0] sm:$0xff]
    %v232 = vld [vmem:[#allocation4 + $0xe8] sm:$0xff]
    %v233 = vld [vmem:[#allocation4 + $0xf0] sm:$0xff]
    %v234 = vld [vmem:[#allocation4 + $0xf8] sm:$0xff]
    %v235 = vld [vmem:[%s4] sm:$0x3]
    %v237 = vlaneseq
    %v238 = vshrl.u32 %v237, 7
    %v239 = vsub.s32 0, %v238
    %v240 = vrot.slane %v235, %v239
    %v241 = vlaneseq
    %v242 = vshrl.u32 %v241, 7
    %v243 = vsub.s32 1, %v242
    %v244 = vrot.slane %v235, %v243
    %v279 = vunpack.c.l.b16 %v203
    %v280 = vunpack.c.h.b16 %v203
    %v281 = vunpack.c.l.b16 %v204
    %v282 = vunpack.c.h.b16 %v204
    %v283 = vunpack.c.l.b16 %v205
    %v284 = vunpack.c.h.b16 %v205
    %v285 = vunpack.c.l.b16 %v206
    %v286 = vunpack.c.h.b16 %v206
    %v287 = vunpack.c.l.b16 %v207
    %v288 = vunpack.c.h.b16 %v207
    %v289 = vunpack.c.l.b16 %v208
    %v290 = vunpack.c.h.b16 %v208
    %v291 = vunpack.c.l.b16 %v209
    %v292 = vunpack.c.h.b16 %v209
    %v293 = vunpack.c.l.b16 %v210
    %v294 = vunpack.c.h.b16 %v210
    %v295 = vunpack.c.l.b16 %v211
    %v296 = vunpack.c.h.b16 %v211
    %v297 = vunpack.c.l.b16 %v212
    %v298 = vunpack.c.h.b16 %v212
    %v299 = vunpack.c.l.b16 %v213
    %v300 = vunpack.c.h.b16 %v213
    %v301 = vunpack.c.l.b16 %v214
    %v302 = vunpack.c.h.b16 %v214
    %v303 = vunpack.c.l.b16 %v215
    %v304 = vunpack.c.h.b16 %v215
    %v305 = vunpack.c.l.b16 %v216
    %v306 = vunpack.c.h.b16 %v216
    %v307 = vunpack.c.l.b16 %v217
    %v308 = vunpack.c.h.b16 %v217
    %v309 = vunpack.c.l.b16 %v218
    %v310 = vunpack.c.h.b16 %v218
    %v311 = vunpack.c.l.b16 %v219
    %v312 = vunpack.c.h.b16 %v219
    %v313 = vunpack.c.l.b16 %v220
    %v314 = vunpack.c.h.b16 %v220
    %v315 = vunpack.c.l.b16 %v221
    %v316 = vunpack.c.h.b16 %v221
    %v317 = vunpack.c.l.b16 %v222
    %v318 = vunpack.c.h.b16 %v222
    %v319 = vunpack.c.l.b16 %v223
    %v320 = vunpack.c.h.b16 %v223
    %v321 = vunpack.c.l.b16 %v224
    %v322 = vunpack.c.h.b16 %v224
    %v323 = vunpack.c.l.b16 %v225
    %v324 = vunpack.c.h.b16 %v225
    %v325 = vunpack.c.l.b16 %v226
    %v326 = vunpack.c.h.b16 %v226
    %v327 = vunpack.c.l.b16 %v227
    %v328 = vunpack.c.h.b16 %v227
    %v329 = vunpack.c.l.b16 %v228
    %v330 = vunpack.c.h.b16 %v228
    %v331 = vunpack.c.l.b16 %v229
    %v332 = vunpack.c.h.b16 %v229
    %v333 = vunpack.c.l.b16 %v230
    %v334 = vunpack.c.h.b16 %v230
    %v335 = vunpack.c.l.b16 %v231
    %v336 = vunpack.c.h.b16 %v231
    %v337 = vunpack.c.l.b16 %v232
    %v338 = vunpack.c.h.b16 %v232
    %v339 = vunpack.c.l.b16 %v233
    %v340 = vunpack.c.h.b16 %v233
    %v341 = vunpack.c.l.b16 %v234
    %v342 = vunpack.c.h.b16 %v234
    %v343 = vpack.c.b16 %v281, %v279
    %v344 = vpack.c.b16 %v282, %v280
    %v345 = vpack.c.b16 %v285, %v283
    %v346 = vpack.c.b16 %v286, %v284
    %v347 = vpack.c.b16 %v289, %v287
    %v348 = vpack.c.b16 %v290, %v288
    %v349 = vpack.c.b16 %v293, %v291
    %v350 = vpack.c.b16 %v294, %v292
    %v351 = vpack.c.b16 %v297, %v295
    %v352 = vpack.c.b16 %v298, %v296
    %v353 = vpack.c.b16 %v301, %v299
    %v354 = vpack.c.b16 %v302, %v300
    %v355 = vpack.c.b16 %v305, %v303
    %v356 = vpack.c.b16 %v306, %v304
    %v357 = vpack.c.b16 %v309, %v307
    %v358 = vpack.c.b16 %v310, %v308
    %v359 = vpack.c.b16 %v313, %v311
    %v360 = vpack.c.b16 %v314, %v312
    %v361 = vpack.c.b16 %v317, %v315
    %v362 = vpack.c.b16 %v318, %v316
    %v363 = vpack.c.b16 %v321, %v319
    %v364 = vpack.c.b16 %v322, %v320
    %v365 = vpack.c.b16 %v325, %v323
    %v366 = vpack.c.b16 %v326, %v324
    %v367 = vpack.c.b16 %v329, %v327
    %v368 = vpack.c.b16 %v330, %v328
    %v369 = vpack.c.b16 %v333, %v331
    %v370 = vpack.c.b16 %v334, %v332
    %v371 = vpack.c.b16 %v337, %v335
    %v372 = vpack.c.b16 %v338, %v336
    %v373 = vpack.c.b16 %v341, %v339
    %v374 = vpack.c.b16 %v342, %v340
    %407 = vmatprep.subr.bf16.mxu0 %v344
    %408 = vmatpush1.bf16.msra.mxu0 %v343
    %409 = vmatprep.subr.bf16.mxu0 %v346
    %410 = vmatpush1.bf16.msra.mxu0 %v345
    %411 = vmatprep.subr.bf16.mxu0 %v348
    %412 = vmatpush1.bf16.msra.mxu0 %v347
    %413 = vmatprep.subr.bf16.mxu0 %v350
    %414 = vmatpush1.bf16.msra.mxu0 %v349
    %415 = vmatprep.subr.bf16.mxu0 %v352
    %416 = vmatpush1.bf16.msra.mxu0 %v351
    %417 = vmatprep.subr.bf16.mxu0 %v354
    %418 = vmatpush1.bf16.msra.mxu0 %v353
    %419 = vmatprep.subr.bf16.mxu0 %v356
    %420 = vmatpush1.bf16.msra.mxu0 %v355
    %421 = vmatprep.subr.bf16.mxu0 %v358
    %422 = vmatpush1.bf16.msra.mxu0 %v357
    %423 = vmatprep.subr.bf16.mxu0 %v360
    %424 = vmatpush1.bf16.msra.mxu0 %v359
    %425 = vmatprep.subr.bf16.mxu0 %v362
    %426 = vmatpush1.bf16.msra.mxu0 %v361
    %427 = vmatprep.subr.bf16.mxu0 %v364
    %428 = vmatpush1.bf16.msra.mxu0 %v363
    %429 = vmatprep.subr.bf16.mxu0 %v366
    %430 = vmatpush1.bf16.msra.mxu0 %v365
    %431 = vmatprep.subr.bf16.mxu0 %v368
    %432 = vmatpush1.bf16.msra.mxu0 %v367
    %433 = vmatprep.subr.bf16.mxu0 %v370
    %434 = vmatpush1.bf16.msra.mxu0 %v369
    %435 = vmatprep.subr.bf16.mxu0 %v372
    %436 = vmatpush1.bf16.msra.mxu0 %v371
    %437 = vmatprep.subr.bf16.mxu0 %v374
    %438 = vmatpush1.bf16.msra.mxu0 %v373
    %439 = vmatprep.mubr.bf16.mxu0 %v202
    %440 = vmatmul.mubr.bf16.gmra.mrb[0].mxu0 %v201
    %v441 = vpop.f32.mrb[0].mxu0
    %v442 = vadd.f32 %v240, %v441
    %v443 = vpop.f32.mrb[0].mxu0
    %v444 = vadd.f32 %v244, %v443
    %v445 = vpop.f32.mrb[0].mxu0
    %v446 = vpop.f32.mrb[0].mxu0
    %447 = vdwg.mxu0
    %v448 = vmax.f32 %v442, 0.0
    %v449 = vmax.f32 %v444, 0.0
    %v450 = vpack.c.bf16 %v448, %v448
    %v451 = vpack.c.bf16 %v449, %v449
    %v452 = vld [vmem:[#allocation6] sm:$0xff]
    %v453 = vld [vmem:[#allocation6 + $0x8] sm:$0xff]
    %v454 = vld [vmem:[#allocation6 + $0x10] sm:$0xff]
    %v455 = vld [vmem:[#allocation6 + $0x18] sm:$0xff]
    %v456 = vld [vmem:[#allocation6 + $0x20] sm:$0xff]
    %v457 = vld [vmem:[#allocation6 + $0x28] sm:$0xff]
    %v458 = vld [vmem:[#allocation6 + $0x30] sm:$0xff]
    %v459 = vld [vmem:[#allocation6 + $0x38] sm:$0xff]
    %v460 = vld [vmem:[#allocation6 + $0x40] sm:$0xff]
    %v461 = vld [vmem:[#allocation6 + $0x48] sm:$0xff]
    %v462 = vld [vmem:[#allocation6 + $0x50] sm:$0xff]
    %v463 = vld [vmem:[#allocation6 + $0x58] sm:$0xff]
    %v464 = vld [vmem:[#allocation6 + $0x60] sm:$0xff]
    %v465 = vld [vmem:[#allocation6 + $0x68] sm:$0xff]
    %v466 = vld [vmem:[#allocation6 + $0x70] sm:$0xff]
    %v467 = vld [vmem:[#allocation6 + $0x78] sm:$0xff]
    %v468 = vld [vmem:[#allocation6 + $0x80] sm:$0xff]
    %v469 = vld [vmem:[#allocation6 + $0x88] sm:$0xff]
    %v470 = vld [vmem:[#allocation6 + $0x90] sm:$0xff]
    %v471 = vld [vmem:[#allocation6 + $0x98] sm:$0xff]
    %v472 = vld [vmem:[#allocation6 + $0xa0] sm:$0xff]
    %v473 = vld [vmem:[#allocation6 + $0xa8] sm:$0xff]
    %v474 = vld [vmem:[#allocation6 + $0xb0] sm:$0xff]
    %v475 = vld [vmem:[#allocation6 + $0xb8] sm:$0xff]
    %v476 = vld [vmem:[#allocation6 + $0xc0] sm:$0xff]
    %v477 = vld [vmem:[#allocation6 + $0xc8] sm:$0xff]
    %v478 = vld [vmem:[#allocation6 + $0xd0] sm:$0xff]
    %v479 = vld [vmem:[#allocation6 + $0xd8] sm:$0xff]
    %v480 = vld [vmem:[#allocation6 + $0xe0] sm:$0xff]
    %v481 = vld [vmem:[#allocation6 + $0xe8] sm:$0xff]
    %v482 = vld [vmem:[#allocation6 + $0xf0] sm:$0xff]
    %v483 = vld [vmem:[#allocation6 + $0xf8] sm:$0xff]
    %v484 = vld [vmem:[%s6] sm:$0x3]
    %v486 = vlaneseq
    %v487 = vshrl.u32 %v486, 7
    %v488 = vsub.s32 0, %v487
    %v489 = vrot.slane %v484, %v488
    %v490 = vlaneseq
    %v491 = vshrl.u32 %v490, 7
    %v492 = vsub.s32 1, %v491
    %v493 = vrot.slane %v484, %v492
    %v528 = vunpack.c.l.b16 %v452
    %v529 = vunpack.c.h.b16 %v452
    %v530 = vunpack.c.l.b16 %v453
    %v531 = vunpack.c.h.b16 %v453
    %v532 = vunpack.c.l.b16 %v454
    %v533 = vunpack.c.h.b16 %v454
    %v534 = vunpack.c.l.b16 %v455
    %v535 = vunpack.c.h.b16 %v455
    %v536 = vunpack.c.l.b16 %v456
    %v537 = vunpack.c.h.b16 %v456
    %v538 = vunpack.c.l.b16 %v457
    %v539 = vunpack.c.h.b16 %v457
    %v540 = vunpack.c.l.b16 %v458
    %v541 = vunpack.c.h.b16 %v458
    %v542 = vunpack.c.l.b16 %v459
    %v543 = vunpack.c.h.b16 %v459
    %v544 = vunpack.c.l.b16 %v460
    %v545 = vunpack.c.h.b16 %v460
    %v546 = vunpack.c.l.b16 %v461
    %v547 = vunpack.c.h.b16 %v461
    %v548 = vunpack.c.l.b16 %v462
    %v549 = vunpack.c.h.b16 %v462
    %v550 = vunpack.c.l.b16 %v463
    %v551 = vunpack.c.h.b16 %v463
    %v552 = vunpack.c.l.b16 %v464
    %v553 = vunpack.c.h.b16 %v464
    %v554 = vunpack.c.l.b16 %v465
    %v555 = vunpack.c.h.b16 %v465
    %v556 = vunpack.c.l.b16 %v466
    %v557 = vunpack.c.h.b16 %v466
    %v558 = vunpack.c.l.b16 %v467
    %v559 = vunpack.c.h.b16 %v467
    %v560 = vunpack.c.l.b16 %v468
    %v561 = vunpack.c.h.b16 %v468
    %v562 = vunpack.c.l.b16 %v469
    %v563 = vunpack.c.h.b16 %v469
    %v564 = vunpack.c.l.b16 %v470
    %v565 = vunpack.c.h.b16 %v470
    %v566 = vunpack.c.l.b16 %v471
    %v567 = vunpack.c.h.b16 %v471
    %v568 = vunpack.c.l.b16 %v472
    %v569 = vunpack.c.h.b16 %v472
    %v570 = vunpack.c.l.b16 %v473
    %v571 = vunpack.c.h.b16 %v473
    %v572 = vunpack.c.l.b16 %v474
    %v573 = vunpack.c.h.b16 %v474
    %v574 = vunpack.c.l.b16 %v475
    %v575 = vunpack.c.h.b16 %v475
    %v576 = vunpack.c.l.b16 %v476
    %v577 = vunpack.c.h.b16 %v476
    %v578 = vunpack.c.l.b16 %v477
    %v579 = vunpack.c.h.b16 %v477
    %v580 = vunpack.c.l.b16 %v478
    %v581 = vunpack.c.h.b16 %v478
    %v582 = vunpack.c.l.b16 %v479
    %v583 = vunpack.c.h.b16 %v479
    %v584 = vunpack.c.l.b16 %v480
    %v585 = vunpack.c.h.b16 %v480
    %v586 = vunpack.c.l.b16 %v481
    %v587 = vunpack.c.h.b16 %v481
    %v588 = vunpack.c.l.b16 %v482
    %v589 = vunpack.c.h.b16 %v482
    %v590 = vunpack.c.l.b16 %v483
    %v591 = vunpack.c.h.b16 %v483
    %v592 = vpack.c.b16 %v530, %v528
    %v593 = vpack.c.b16 %v531, %v529
    %v594 = vpack.c.b16 %v534, %v532
    %v595 = vpack.c.b16 %v535, %v533
    %v596 = vpack.c.b16 %v538, %v536
    %v597 = vpack.c.b16 %v539, %v537
    %v598 = vpack.c.b16 %v542, %v540
    %v599 = vpack.c.b16 %v543, %v541
    %v600 = vpack.c.b16 %v546, %v544
    %v601 = vpack.c.b16 %v547, %v545
    %v602 = vpack.c.b16 %v550, %v548
    %v603 = vpack.c.b16 %v551, %v549
    %v604 = vpack.c.b16 %v554, %v552
    %v605 = vpack.c.b16 %v555, %v553
    %v606 = vpack.c.b16 %v558, %v556
    %v607 = vpack.c.b16 %v559, %v557
    %v608 = vpack.c.b16 %v562, %v560
    %v609 = vpack.c.b16 %v563, %v561
    %v610 = vpack.c.b16 %v566, %v564
    %v611 = vpack.c.b16 %v567, %v565
    %v612 = vpack.c.b16 %v570, %v568
    %v613 = vpack.c.b16 %v571, %v569
    %v614 = vpack.c.b16 %v574, %v572
    %v615 = vpack.c.b16 %v575, %v573
    %v616 = vpack.c.b16 %v578, %v576
    %v617 = vpack.c.b16 %v579, %v577
    %v618 = vpack.c.b16 %v582, %v580
    %v619 = vpack.c.b16 %v583, %v581
    %v620 = vpack.c.b16 %v586, %v584
    %v621 = vpack.c.b16 %v587, %v585
    %v622 = vpack.c.b16 %v590, %v588
    %v623 = vpack.c.b16 %v591, %v589
    %656 = vmatprep.subr.bf16.mxu0 %v593
    %657 = vmatpush1.bf16.msra.mxu0 %v592
    %658 = vmatprep.subr.bf16.mxu0 %v595
    %659 = vmatpush1.bf16.msra.mxu0 %v594
    %660 = vmatprep.subr.bf16.mxu0 %v597
    %661 = vmatpush1.bf16.msra.mxu0 %v596
    %662 = vmatprep.subr.bf16.mxu0 %v599
    %663 = vmatpush1.bf16.msra.mxu0 %v598
    %664 = vmatprep.subr.bf16.mxu0 %v601
    %665 = vmatpush1.bf16.msra.mxu0 %v600
    %666 = vmatprep.subr.bf16.mxu0 %v603
    %667 = vmatpush1.bf16.msra.mxu0 %v602
    %668 = vmatprep.subr.bf16.mxu0 %v605
    %669 = vmatpush1.bf16.msra.mxu0 %v604
    %670 = vmatprep.subr.bf16.mxu0 %v607
    %671 = vmatpush1.bf16.msra.mxu0 %v606
    %672 = vmatprep.subr.bf16.mxu0 %v609
    %673 = vmatpush1.bf16.msra.mxu0 %v608
    %674 = vmatprep.subr.bf16.mxu0 %v611
    %675 = vmatpush1.bf16.msra.mxu0 %v610
    %676 = vmatprep.subr.bf16.mxu0 %v613
    %677 = vmatpush1.bf16.msra.mxu0 %v612
    %678 = vmatprep.subr.bf16.mxu0 %v615
    %679 = vmatpush1.bf16.msra.mxu0 %v614
    %680 = vmatprep.subr.bf16.mxu0 %v617
    %681 = vmatpush1.bf16.msra.mxu0 %v616
    %682 = vmatprep.subr.bf16.mxu0 %v619
    %683 = vmatpush1.bf16.msra.mxu0 %v618
    %684 = vmatprep.subr.bf16.mxu0 %v621
    %685 = vmatpush1.bf16.msra.mxu0 %v620
    %686 = vmatprep.subr.bf16.mxu0 %v623
    %687 = vmatpush1.bf16.msra.mxu0 %v622
    %688 = vmatprep.mubr.bf16.mxu0 %v451
    %689 = vmatmul.mubr.bf16.gmra.mrb[0].mxu0 %v450
    %v690 = vpop.f32.mrb[0].mxu0
    %v691 = vadd.f32 %v489, %v690
    %v692 = vpop.f32.mrb[0].mxu0
    %v693 = vadd.f32 %v493, %v692
    %v694 = vpop.f32.mrb[0].mxu0
    %v695 = vpop.f32.mrb[0].mxu0
    %696 = vdwg.mxu0
    %v697 = vmax.f32 %v691, 0.0
    %v698 = vmax.f32 %v693, 0.0
    %v699 = vpack.c.bf16 %v697, %v697
    %v700 = vpack.c.bf16 %v698, %v698
    %v701 = vld [vmem:[#allocation7] sm:$0xff]
    %v702 = vld [vmem:[#allocation7 + $0x8] sm:$0xff]
    %v703 = vld [vmem:[#allocation7 + $0x10] sm:$0xff]
    %v704 = vld [vmem:[#allocation7 + $0x18] sm:$0xff]
    %v705 = vld [vmem:[#allocation7 + $0x20] sm:$0xff]
    %v706 = vld [vmem:[#allocation7 + $0x28] sm:$0xff]
    %v707 = vld [vmem:[#allocation7 + $0x30] sm:$0xff]
    %v708 = vld [vmem:[#allocation7 + $0x38] sm:$0xff]
    %v709 = vld [vmem:[#allocation7 + $0x40] sm:$0xff]
    %v710 = vld [vmem:[#allocation7 + $0x48] sm:$0xff]
    %v711 = vld [vmem:[#allocation7 + $0x50] sm:$0xff]
    %v712 = vld [vmem:[#allocation7 + $0x58] sm:$0xff]
    %v713 = vld [vmem:[#allocation7 + $0x60] sm:$0xff]
    %v714 = vld [vmem:[#allocation7 + $0x68] sm:$0xff]
    %v715 = vld [vmem:[#allocation7 + $0x70] sm:$0xff]
    %v716 = vld [vmem:[#allocation7 + $0x78] sm:$0xff]
    %v717 = vld [vmem:[#allocation7 + $0x80] sm:$0xff]
    %v718 = vld [vmem:[#allocation7 + $0x88] sm:$0xff]
    %v719 = vld [vmem:[#allocation7 + $0x90] sm:$0xff]
    %v720 = vld [vmem:[#allocation7 + $0x98] sm:$0xff]
    %v721 = vld [vmem:[#allocation7 + $0xa0] sm:$0xff]
    %v722 = vld [vmem:[#allocation7 + $0xa8] sm:$0xff]
    %v723 = vld [vmem:[#allocation7 + $0xb0] sm:$0xff]
    %v724 = vld [vmem:[#allocation7 + $0xb8] sm:$0xff]
    %v725 = vld [vmem:[#allocation7 + $0xc0] sm:$0xff]
    %v726 = vld [vmem:[#allocation7 + $0xc8] sm:$0xff]
    %v727 = vld [vmem:[#allocation7 + $0xd0] sm:$0xff]
    %v728 = vld [vmem:[#allocation7 + $0xd8] sm:$0xff]
    %v729 = vld [vmem:[#allocation7 + $0xe0] sm:$0xff]
    %v730 = vld [vmem:[#allocation7 + $0xe8] sm:$0xff]
    %v731 = vld [vmem:[#allocation7 + $0xf0] sm:$0xff]
    %v732 = vld [vmem:[#allocation7 + $0xf8] sm:$0xff]
    %v733 = vld [vmem:[#allocation9] sm:$0x3]
    %v735 = vlaneseq
    %v736 = vshrl.u32 %v735, 7
    %v737 = vsub.s32 0, %v736
    %v738 = vrot.slane %v733, %v737
    %v739 = vlaneseq
    %v740 = vshrl.u32 %v739, 7
    %v741 = vsub.s32 1, %v740
    %v742 = vrot.slane %v733, %v741
    %v777 = vunpack.c.l.b16 %v701
    %v778 = vunpack.c.h.b16 %v701
    %v779 = vunpack.c.l.b16 %v702
    %v780 = vunpack.c.h.b16 %v702
    %v781 = vunpack.c.l.b16 %v703
    %v782 = vunpack.c.h.b16 %v703
    %v783 = vunpack.c.l.b16 %v704
    %v784 = vunpack.c.h.b16 %v704
    %v785 = vunpack.c.l.b16 %v705
    %v786 = vunpack.c.h.b16 %v705
    %v787 = vunpack.c.l.b16 %v706
    %v788 = vunpack.c.h.b16 %v706
    %v789 = vunpack.c.l.b16 %v707
    %v790 = vunpack.c.h.b16 %v707
    %v791 = vunpack.c.l.b16 %v708
    %v792 = vunpack.c.h.b16 %v708
    %v793 = vunpack.c.l.b16 %v709
    %v794 = vunpack.c.h.b16 %v709
    %v795 = vunpack.c.l.b16 %v710
    %v796 = vunpack.c.h.b16 %v710
    %v797 = vunpack.c.l.b16 %v711
    %v798 = vunpack.c.h.b16 %v711
    %v799 = vunpack.c.l.b16 %v712
    %v800 = vunpack.c.h.b16 %v712
    %v801 = vunpack.c.l.b16 %v713
    %v802 = vunpack.c.h.b16 %v713
    %v803 = vunpack.c.l.b16 %v714
    %v804 = vunpack.c.h.b16 %v714
    %v805 = vunpack.c.l.b16 %v715
    %v806 = vunpack.c.h.b16 %v715
    %v807 = vunpack.c.l.b16 %v716
    %v808 = vunpack.c.h.b16 %v716
    %v809 = vunpack.c.l.b16 %v717
    %v810 = vunpack.c.h.b16 %v717
    %v811 = vunpack.c.l.b16 %v718
    %v812 = vunpack.c.h.b16 %v718
    %v813 = vunpack.c.l.b16 %v719
    %v814 = vunpack.c.h.b16 %v719
    %v815 = vunpack.c.l.b16 %v720
    %v816 = vunpack.c.h.b16 %v720
    %v817 = vunpack.c.l.b16 %v721
    %v818 = vunpack.c.h.b16 %v721
    %v819 = vunpack.c.l.b16 %v722
    %v820 = vunpack.c.h.b16 %v722
    %v821 = vunpack.c.l.b16 %v723
    %v822 = vunpack.c.h.b16 %v723
    %v823 = vunpack.c.l.b16 %v724
    %v824 = vunpack.c.h.b16 %v724
    %v825 = vunpack.c.l.b16 %v725
    %v826 = vunpack.c.h.b16 %v725
    %v827 = vunpack.c.l.b16 %v726
    %v828 = vunpack.c.h.b16 %v726
    %v829 = vunpack.c.l.b16 %v727
    %v830 = vunpack.c.h.b16 %v727
    %v831 = vunpack.c.l.b16 %v728
    %v832 = vunpack.c.h.b16 %v728
    %v833 = vunpack.c.l.b16 %v729
    %v834 = vunpack.c.h.b16 %v729
    %v835 = vunpack.c.l.b16 %v730
    %v836 = vunpack.c.h.b16 %v730
    %v837 = vunpack.c.l.b16 %v731
    %v838 = vunpack.c.h.b16 %v731
    %v839 = vunpack.c.l.b16 %v732
    %v840 = vunpack.c.h.b16 %v732
    %v841 = vpack.c.b16 %v779, %v777
    %v842 = vpack.c.b16 %v780, %v778
    %v843 = vpack.c.b16 %v783, %v781
    %v844 = vpack.c.b16 %v784, %v782
    %v845 = vpack.c.b16 %v787, %v785
    %v846 = vpack.c.b16 %v788, %v786
    %v847 = vpack.c.b16 %v791, %v789
    %v848 = vpack.c.b16 %v792, %v790
    %v849 = vpack.c.b16 %v795, %v793
    %v850 = vpack.c.b16 %v796, %v794
    %v851 = vpack.c.b16 %v799, %v797
    %v852 = vpack.c.b16 %v800, %v798
    %v853 = vpack.c.b16 %v803, %v801
    %v854 = vpack.c.b16 %v804, %v802
    %v855 = vpack.c.b16 %v807, %v805
    %v856 = vpack.c.b16 %v808, %v806
    %v857 = vpack.c.b16 %v811, %v809
    %v858 = vpack.c.b16 %v812, %v810
    %v859 = vpack.c.b16 %v815, %v813
    %v860 = vpack.c.b16 %v816, %v814
    %v861 = vpack.c.b16 %v819, %v817
    %v862 = vpack.c.b16 %v820, %v818
    %v863 = vpack.c.b16 %v823, %v821
    %v864 = vpack.c.b16 %v824, %v822
    %v865 = vpack.c.b16 %v827, %v825
    %v866 = vpack.c.b16 %v828, %v826
    %v867 = vpack.c.b16 %v831, %v829
    %v868 = vpack.c.b16 %v832, %v830
    %v869 = vpack.c.b16 %v835, %v833
    %v870 = vpack.c.b16 %v836, %v834
    %v871 = vpack.c.b16 %v839, %v837
    %v872 = vpack.c.b16 %v840, %v838
    %905 = vmatprep.subr.bf16.mxu0 %v842
    %906 = vmatpush1.bf16.msra.mxu0 %v841
    %907 = vmatprep.subr.bf16.mxu0 %v844
    %908 = vmatpush1.bf16.msra.mxu0 %v843
    %909 = vmatprep.subr.bf16.mxu0 %v846
    %910 = vmatpush1.bf16.msra.mxu0 %v845
    %911 = vmatprep.subr.bf16.mxu0 %v848
    %912 = vmatpush1.bf16.msra.mxu0 %v847
    %913 = vmatprep.subr.bf16.mxu0 %v850
    %914 = vmatpush1.bf16.msra.mxu0 %v849
    %915 = vmatprep.subr.bf16.mxu0 %v852
    %916 = vmatpush1.bf16.msra.mxu0 %v851
    %917 = vmatprep.subr.bf16.mxu0 %v854
    %918 = vmatpush1.bf16.msra.mxu0 %v853
    %919 = vmatprep.subr.bf16.mxu0 %v856
    %920 = vmatpush1.bf16.msra.mxu0 %v855
    %921 = vmatprep.subr.bf16.mxu0 %v858
    %922 = vmatpush1.bf16.msra.mxu0 %v857
    %923 = vmatprep.subr.bf16.mxu0 %v860
    %924 = vmatpush1.bf16.msra.mxu0 %v859
    %925 = vmatprep.subr.bf16.mxu0 %v862
    %926 = vmatpush1.bf16.msra.mxu0 %v861
    %927 = vmatprep.subr.bf16.mxu0 %v864
    %928 = vmatpush1.bf16.msra.mxu0 %v863
    %929 = vmatprep.subr.bf16.mxu0 %v866
    %930 = vmatpush1.bf16.msra.mxu0 %v865
    %931 = vmatprep.subr.bf16.mxu0 %v868
    %932 = vmatpush1.bf16.msra.mxu0 %v867
    %933 = vmatprep.subr.bf16.mxu0 %v870
    %934 = vmatpush1.bf16.msra.mxu0 %v869
    %935 = vmatprep.subr.bf16.mxu0 %v872
    %936 = vmatpush1.bf16.msra.mxu0 %v871
    %937 = vmatprep.mubr.bf16.mxu0 %v700
    %938 = vmatmul.mubr.bf16.gmra.mrb[0].mxu0 %v699
    %v939 = vpop.f32.mrb[0].mxu0
    %v940 = vadd.f32 %v738, %v939
    %v941 = vpop.f32.mrb[0].mxu0
    %v942 = vadd.f32 %v742, %v941
    %v943 = vpop.f32.mrb[0].mxu0
    %v944 = vpop.f32.mrb[0].mxu0
    %945 = vdwg.mxu0
    %v946 = vmax.f32 %v940, 0.0
    %v947 = vmax.f32 %v942, 0.0
    %v948 = vpack.c.bf16 %v946, %v946
    %v949 = vpack.c.bf16 %v947, %v947
    %v950 = vld [vmem:[#allocation10] sm:$0xf]
    %v951 = vld [vmem:[#allocation10 + $0x4] sm:$0xf]
    %v952 = vld [vmem:[#allocation10 + $0x8] sm:$0xf]
    %v953 = vld [vmem:[#allocation10 + $0xc] sm:$0xf]
    %v954 = vld [vmem:[#allocation10 + $0x10] sm:$0xf]
    %v955 = vld [vmem:[#allocation10 + $0x14] sm:$0xf]
    %v956 = vld [vmem:[#allocation10 + $0x18] sm:$0xf]
    %v957 = vld [vmem:[#allocation10 + $0x1c] sm:$0xf]
    %v958 = vld [vmem:[#allocation10 + $0x20] sm:$0xf]
    %v959 = vld [vmem:[#allocation10 + $0x24] sm:$0xf]
    %v960 = vld [vmem:[#allocation10 + $0x28] sm:$0xf]
    %v961 = vld [vmem:[#allocation10 + $0x2c] sm:$0xf]
    %v962 = vld [vmem:[#allocation10 + $0x30] sm:$0xf]
    %v963 = vld [vmem:[#allocation10 + $0x34] sm:$0xf]
    %v964 = vld [vmem:[#allocation10 + $0x38] sm:$0xf]
    %v965 = vld [vmem:[#allocation10 + $0x3c] sm:$0xf]
    %v966 = vld [vmem:[#allocation10 + $0x40] sm:$0xf]
    %v967 = vld [vmem:[#allocation10 + $0x44] sm:$0xf]
    %v968 = vld [vmem:[#allocation10 + $0x48] sm:$0xf]
    %v969 = vld [vmem:[#allocation10 + $0x4c] sm:$0xf]
    %v970 = vld [vmem:[#allocation10 + $0x50] sm:$0xf]
    %v971 = vld [vmem:[#allocation10 + $0x54] sm:$0xf]
    %v972 = vld [vmem:[#allocation10 + $0x58] sm:$0xf]
    %v973 = vld [vmem:[#allocation10 + $0x5c] sm:$0xf]
    %v974 = vld [vmem:[#allocation10 + $0x60] sm:$0xf]
    %v975 = vld [vmem:[#allocation10 + $0x64] sm:$0xf]
    %v976 = vld [vmem:[#allocation10 + $0x68] sm:$0xf]
    %v977 = vld [vmem:[#allocation10 + $0x6c] sm:$0xf]
    %v978 = vld [vmem:[#allocation10 + $0x70] sm:$0xf]
    %v979 = vld [vmem:[#allocation10 + $0x74] sm:$0xf]
    %v980 = vld [vmem:[#allocation10 + $0x78] sm:$0xf]
    %v981 = vld [vmem:[#allocation10 + $0x7c] sm:$0xf]
    %v982 = vld [vmem:[#allocation12] sm:$0x1]
    %v984 = vlaneseq
    %v985 = vshrl.u32 %v984, 7
    %v986 = vsub.s32 0, %v985
    %v987 = vrot.slane %v982, %v986
    %v1021 = vunpack.c.l.b16 %v950
    %v1022 = vunpack.c.l.b16 %v951
    %v1023 = vunpack.c.l.b16 %v952
    %v1024 = vunpack.c.l.b16 %v953
    %v1025 = vunpack.c.l.b16 %v954
    %v1026 = vunpack.c.l.b16 %v955
    %v1027 = vunpack.c.l.b16 %v956
    %v1028 = vunpack.c.l.b16 %v957
    %v1029 = vunpack.c.l.b16 %v958
    %v1030 = vunpack.c.l.b16 %v959
    %v1031 = vunpack.c.l.b16 %v960
    %v1032 = vunpack.c.l.b16 %v961
    %v1033 = vunpack.c.l.b16 %v962
    %v1034 = vunpack.c.l.b16 %v963
    %v1035 = vunpack.c.l.b16 %v964
    %v1036 = vunpack.c.l.b16 %v965
    %v1037 = vunpack.c.l.b16 %v966
    %v1038 = vunpack.c.l.b16 %v967
    %v1039 = vunpack.c.l.b16 %v968
    %v1040 = vunpack.c.l.b16 %v969
    %v1041 = vunpack.c.l.b16 %v970
    %v1042 = vunpack.c.l.b16 %v971
    %v1043 = vunpack.c.l.b16 %v972
    %v1044 = vunpack.c.l.b16 %v973
    %v1045 = vunpack.c.l.b16 %v974
    %v1046 = vunpack.c.l.b16 %v975
    %v1047 = vunpack.c.l.b16 %v976
    %v1048 = vunpack.c.l.b16 %v977
    %v1049 = vunpack.c.l.b16 %v978
    %v1050 = vunpack.c.l.b16 %v979
    %v1051 = vunpack.c.l.b16 %v980
    %v1052 = vunpack.c.l.b16 %v981
    %v1053 = vpack.c.b16 %v1022, %v1021
    %v1054 = vpack.c.b16 %v1024, %v1023
    %v1055 = vpack.c.b16 %v1026, %v1025
    %v1056 = vpack.c.b16 %v1028, %v1027
    %v1057 = vpack.c.b16 %v1030, %v1029
    %v1058 = vpack.c.b16 %v1032, %v1031
    %v1059 = vpack.c.b16 %v1034, %v1033
    %v1060 = vpack.c.b16 %v1036, %v1035
    %v1061 = vpack.c.b16 %v1038, %v1037
    %v1062 = vpack.c.b16 %v1040, %v1039
    %v1063 = vpack.c.b16 %v1042, %v1041
    %v1064 = vpack.c.b16 %v1044, %v1043
    %v1065 = vpack.c.b16 %v1046, %v1045
    %v1066 = vpack.c.b16 %v1048, %v1047
    %v1067 = vpack.c.b16 %v1050, %v1049
    %v1068 = vpack.c.b16 %v1052, %v1051
    %1085 = vmatprep.subr.bf16.mxu0 0
    %1086 = vmatpush1.bf16.msra.mxu0 %v1053
    %1087 = vmatprep.subr.bf16.mxu0 0
    %1088 = vmatpush1.bf16.msra.mxu0 %v1054
    %1089 = vmatprep.subr.bf16.mxu0 0
    %1090 = vmatpush1.bf16.msra.mxu0 %v1055
    %1091 = vmatprep.subr.bf16.mxu0 0
    %1092 = vmatpush1.bf16.msra.mxu0 %v1056
    %1093 = vmatprep.subr.bf16.mxu0 0
    %1094 = vmatpush1.bf16.msra.mxu0 %v1057
    %1095 = vmatprep.subr.bf16.mxu0 0
    %1096 = vmatpush1.bf16.msra.mxu0 %v1058
    %1097 = vmatprep.subr.bf16.mxu0 0
    %1098 = vmatpush1.bf16.msra.mxu0 %v1059
    %1099 = vmatprep.subr.bf16.mxu0 0
    %1100 = vmatpush1.bf16.msra.mxu0 %v1060
    %1101 = vmatprep.subr.bf16.mxu0 0
    %1102 = vmatpush1.bf16.msra.mxu0 %v1061
    %1103 = vmatprep.subr.bf16.mxu0 0
    %1104 = vmatpush1.bf16.msra.mxu0 %v1062
    %1105 = vmatprep.subr.bf16.mxu0 0
    %1106 = vmatpush1.bf16.msra.mxu0 %v1063
    %1107 = vmatprep.subr.bf16.mxu0 0
    %1108 = vmatpush1.bf16.msra.mxu0 %v1064
    %1109 = vmatprep.subr.bf16.mxu0 0
    %1110 = vmatpush1.bf16.msra.mxu0 %v1065
    %1111 = vmatprep.subr.bf16.mxu0 0
    %1112 = vmatpush1.bf16.msra.mxu0 %v1066
    %1113 = vmatprep.subr.bf16.mxu0 0
    %1114 = vmatpush1.bf16.msra.mxu0 %v1067
    %1115 = vmatprep.subr.bf16.mxu0 0
    %1116 = vmatpush1.bf16.msra.mxu0 %v1068
    %1117 = vmatprep.mubr.bf16.mxu0 %v949
    %1118 = vmatmul.mubr.bf16.gmra.mrb[0].mxu0 %v948
    %v1119 = vpop.f32.mrb[0].mxu0
    %v1120 = vadd.f32 %v987, %v1119
    %v1121 = vpop.f32.mrb[0].mxu0
    %v1122 = vpop.f32.mrb[0].mxu0
    %v1123 = vpop.f32.mrb[0].mxu0
    %1124 = vdwg.mxu0
    %1125 = vst [vmem:[%s11] sm:$0xff] %v1120
    // Predicated region
    $region74: #{qnetwork_forward.1} parent=1 // pred_check
      _
    $region75: #{qnetwork_forward.1} parent=1 // pred_check_branch
      %1127 = sbr.rel (0) target = $region77
    $region76: #{qnetwork_forward.1} parent=1 // pred_region
      _
    $region77: #{qnetwork_forward.1} parent=1 // pred_fallthru
      _
    // Predicated region
    $region78: #{qnetwork_forward.1} parent=1 // pred_check
      _
    $region79: #{qnetwork_forward.1} parent=1 // pred_check_branch
      %1129 = sbr.rel (0) target = $region81
    $region80: #{qnetwork_forward.1} parent=1 // pred_region
      _
    $region81: #{qnetwork_forward.1} parent=1 // pred_fallthru
      _
    %1130 = vsyncpa [#allocation3], 1
    %1131 = vsyncpa [#allocation5], 1
    %1132 = vsyncpa [#allocation8], 1
    %1133 = vsyncpa [#allocation11], 1

</llo_original>
